<compile_context>
chip_gen: v6e
topology: v6e:2x2x1
jax: 0.10.0
libtpu: 0.0.40
codegen_flags: <defaults>
</compile_context>

<pallas_src>
import math

import jax
import jax.numpy as jnp
import numpy as np
from jax.experimental import pallas as pl
from jax.experimental.pallas import tpu as pltpu


def _copy_kernel(x_ref, o_ref):
    o_ref[...] = x_ref[...]


_BLOCK_BYTE_BUDGET = 2 * 1024 * 1024  # per-block VMEM footprint (x4 buffers ~ 8 MiB)


def _resolve_shape(in_shape, new_shape):
    """Resolve torch-style new_shape: 0 keeps the input dim, -1 is inferred."""
    resolved = [in_shape[i] if d == 0 else int(d) for i, d in enumerate(new_shape)]
    total = math.prod(in_shape)
    if resolved.count(-1) > 1:
        raise ValueError(f"only one -1 allowed in new_shape, got {new_shape}")
    if -1 in resolved:
        rest = math.prod(d for d in resolved if d != -1)
        if rest == 0 or total % rest != 0:
            raise ValueError(f"cannot reshape {in_shape} to {tuple(resolved)}")
        resolved[resolved.index(-1)] = total // rest
    if math.prod(resolved) != total:
        raise ValueError(f"cannot reshape {in_shape} to {tuple(resolved)}")
    return tuple(resolved)


def _choose_slab(total, row_gran):
    """Pick a lane-dense (rows, cols) view of the flat element stream.

    Prefer the widest cols (longer contiguous DMA bursts, unmasked vst) whose
    row count is also a multiple of the sublane granularity; fall back to any
    128-multiple width; return None if total isn't lane-alignable at all.
    """
    widths = (4096, 2048, 1024, 512, 256, 128)
    for cols in widths:
        if total % cols == 0 and (total // cols) % row_gran == 0:
            return total // cols, cols
    for cols in widths:
        if total % cols == 0:
            return total // cols, cols
    return None


def _pallas_copy(x):
    """Physical copy of `x` through a tiled Pallas VMEM pipeline."""
    total = math.prod(x.shape)
    itemsize = jnp.dtype(x.dtype).itemsize
    # Sublane granularity: packed dtypes want 16 (bf16) / 32 (int8) rows.
    row_gran = {4: 8, 2: 16, 1: 32}.get(itemsize, 8)

    slab_dims = _choose_slab(total, row_gran)
    if slab_dims is None:
        # Element count not a multiple of 128: lane-dense slab impossible
        # without padding, and the copy isn't semantically required anyway.
        return jnp.copy(x)

    rows, cols = slab_dims
    slab = x.reshape(rows, cols)

    if rows <= row_gran:
        # Tiny slab: one full-extent block (block_shape == array dims).
        tile_r = rows
    else:
        # Byte-budget driven tile size, rounded to the sublane granularity.
        tile_r = (_BLOCK_BYTE_BUDGET // (cols * itemsize)) // row_gran * row_gran
        tile_r = max(tile_r, row_gran)
        if tile_r >= rows and rows >= 2 * row_gran:
            # Split into >= 2 blocks so both v7x TensorCores get work.
            half = -(-rows // 2)
            tile_r = -(-half // row_gran) * row_gran
        tile_r = min(tile_r, rows)

    grid = (pl.cdiv(rows, tile_r),)  # ragged tail handled by masked edge block
    block_bytes = tile_r * cols * itemsize
    vmem_limit = min(max(4 * block_bytes + (4 << 20), 16 << 20), 32 << 20)

    out = pl.pallas_call(
        _copy_kernel,
        out_shape=jax.ShapeDtypeStruct((rows, cols), slab.dtype),
        grid_spec=pltpu.PrefetchScalarGridSpec(
            num_scalar_prefetch=0,
            grid=grid,
            in_specs=[pl.BlockSpec((tile_r, cols), lambda i: (i, 0))],
            out_specs=pl.BlockSpec((tile_r, cols), lambda i: (i, 0)),
        ),
        compiler_params=pltpu.CompilerParams(
            dimension_semantics=("parallel",),
            vmem_limit_bytes=vmem_limit,
        ),
        cost_estimate=pl.CostEstimate(
            flops=0, transcendentals=0, bytes_accessed=2 * total * itemsize
        ),
    )(slab)
    return out.reshape(x.shape)


def reshape_forward(x, new_shape, force_copy=False):
    """Pallas-backed equivalent of Reshape(*new_shape).forward(x).

    Default path is metadata-only (matches torch .view on a contiguous
    tensor): no kernel launch, no HBM traffic. force_copy=True materializes a
    fresh buffer via the Pallas tiled copy kernel.
    """
    resolved = _resolve_shape(x.shape, new_shape)
    if not force_copy:
        return jnp.reshape(x, resolved)
    return jnp.reshape(_pallas_copy(x), resolved)


if __name__ == "__main__":
    key = jax.random.PRNGKey(0)
    k1, k2 = jax.random.split(key)

    # Input in NCHW-style layout: (batch=2, channels=4, H=16, W=16)
    x = jax.random.normal(k1, (2, 4, 16, 16), dtype=jnp.float32)
    new_shape = (0, 0, 256)  # keep batch & channels, flatten spatial dims
    expected = jnp.reshape(x, (2, 4, 256))

    # Fast path: metadata-only reshape (no pallas_call at all).
    y_fast = jax.block_until_ready(reshape_forward(x, new_shape))
    assert y_fast.shape == (2, 4, 256) and y_fast.dtype == x.dtype
    np.testing.assert_array_equal(np.asarray(y_fast), np.asarray(expected))

    # Forced-copy path: exercises the Pallas tiled copy kernel (single block).
    y_copy = jax.block_until_ready(reshape_forward(x, new_shape, force_copy=True))
    assert y_copy.shape == (2, 4, 256) and y_copy.dtype == x.dtype
    np.testing.assert_array_equal(np.asarray(y_copy), np.asarray(expected))

    # Slightly larger input exercises the multi-block (grid >= 2) path and -1.
    x2 = jax.random.normal(k2, (8, 16, 32, 32), dtype=jnp.float32)
    y2 = jax.block_until_ready(reshape_forward(x2, (0, 0, -1), force_copy=True))
    np.testing.assert_array_equal(
        np.asarray(y2), np.asarray(jnp.reshape(x2, (8, 16, 1024)))
    )

    print("KERNEL_OK")
</pallas_src>

<mosaic_0001>
module attributes {stable_mosaic.version = 11 : i64} {
  func.func @_copy_kernel(%arg0: i32, %arg1: memref<8x256xf32, #tpu.memory_space<vmem>>, %arg2: memref<8x256xf32, #tpu.memory_space<vmem>>) attributes {dimension_semantics = [#tpu.dimension_semantics<parallel>], iteration_bounds = array<i64: 1>, scalar_prefetch = 0 : i64, scratch_operands = 0 : i64, tpu.core_type = #tpu.core_type<tc>, window_params = [{transform_indices = @transform_0, window_bounds = array<i64: 8, 256>}, {transform_indices = @transform_1, window_bounds = array<i64: 8, 256>}]} {
    %c0 = arith.constant 0 : index
    %c0_0 = arith.constant 0 : index
    %0 = vector.load %arg1[%c0, %c0_0] : memref<8x256xf32, #tpu.memory_space<vmem>>, vector<8x256xf32>
    %c0_1 = arith.constant 0 : index
    %c0_2 = arith.constant 0 : index
    %1 = vector.load %arg2[%c0_1, %c0_2] : memref<8x256xf32, #tpu.memory_space<vmem>>, vector<8x256xf32>
    tpu.vector_store %arg2[%c0_1, %c0_2], %0 {strides = array<i32>} : memref<8x256xf32, #tpu.memory_space<vmem>>, vector<8x256xf32>,
    return
  }
  func.func @transform_0(%arg0: i32) -> (i32, i32) {
    %c0_i32 = arith.constant 0 : i32
    %c0_i32_0 = arith.constant 0 : i32
    return %arg0, %c0_i32 : i32, i32
  }
  func.func @transform_1(%arg0: i32) -> (i32, i32) {
    %c0_i32 = arith.constant 0 : i32
    %c0_i32_0 = arith.constant 0 : i32
    return %arg0, %c0_i32 : i32, i32
  }
}

</mosaic_0001>

<llo_original>
// kernel: tpu_custom_call.1
$region0: #{tpu_custom_call.1}
  #allocation0 [shape = 'u32[]', space=smem, size = 0x4, offset = 0x4, fixed_abs, tag = 'smem constant byte address 0x4 - core index']
  #allocation1 [shape = 'u32[144,128]{1,0:T(1,128)}', space=vmem, size = 0x12000, scoped, tag = 'internal scratch']
  %s0 = inlined_call_operand.hbm [shape: f32[8,256], index: 0, kind: input, shape index: {}]
  %s1 = inlined_call_operand.hbm [shape: f32[8,256], index: 1, kind: output, shape index: {}]
  %s2 = sld [smem:[#allocation0]]
  $region18: #{tpu_custom_call.1} parent=0
    _
  %s4 = ssub.s32 1, %s2
  %s5 = scalar_select 0, %s4, %s2
  $region1: #{tpu_custom_call.1} parent=0
    #allocation2 [shape = 'u8[8192]{0}', space=vmem, size = 0x2000, scoped, tag = 'input window, operand 0, single buffered']
    #allocation3 [shape = 's32[1]{0}', space=sflag, size = 0x4, scoped, tag = 'scoped memory for tpu_custom_call.1']
    #allocation4 [shape = 's32[1]{0}', space=sflag, size = 0x4, scoped, tag = 'scoped memory for tpu_custom_call.1']
    #allocation5 [shape = 'u8[8192]{0}', space=vmem, size = 0x2000, scoped, tag = 'output window, operand 0, single buffered']
    %6 = vsyncpa [#allocation3], 0
    %7 = vsyncpa [#allocation4], 0
    // Predicated region
    $region2: #{tpu_custom_call.1} parent=1 // pred_check
      _
    $region3: #{tpu_custom_call.1} parent=1 // pred_check_branch
      %9 = sbr.rel (0) target = $region5
    $region4: #{tpu_custom_call.1} parent=1 // pred_region
      %s11 = ssub.s32 256, 256
      %12 = vsyncadd [#allocation3], %s11
      %s14 = sshll.u32 [#allocation2], 4
      %s15 = int_to_ptr.vmem [resolvable:$true] %s14
      %17 = dma.hbm_to_vmem [thread:$0]  %s0, 256, %s15, [#allocation3]
    $region5: #{tpu_custom_call.1} parent=1 // pred_fallthru
      _
    // Predicated region
    $region6: #{tpu_custom_call.1} parent=1 // pred_check
      _
    $region7: #{tpu_custom_call.1} parent=1 // pred_check_branch
      %19 = sbr.rel (0) target = $region9
    $region8: #{tpu_custom_call.1} parent=1 // pred_region
      %20 = dma.done [#allocation3], 256
    $region9: #{tpu_custom_call.1} parent=1 // pred_fallthru
      _
    %v21 = vld [vmem:[#allocation2] sm:$0xff]
    %v22 = vld [vmem:[#allocation2 + $0x8] sm:$0xff]
    %23 = vst [vmem:[#allocation5] sm:$0xff] %v21
    %24 = vst [vmem:[#allocation5 + $0x8] sm:$0xff] %v22
    // Predicated region
    $region10: #{tpu_custom_call.1} parent=1 // pred_check
      _
    $region11: #{tpu_custom_call.1} parent=1 // pred_check_branch
      %26 = sbr.rel (0) target = $region13
    $region12: #{tpu_custom_call.1} parent=1 // pred_region
      %s28 = ssub.s32 256, 256
      %29 = vsyncadd [#allocation4], %s28
      %s31 = sshll.u32 [#allocation5], 4
      %s32 = int_to_ptr.vmem [resolvable:$true] %s31
      %34 = dma.vmem_to_hbm [thread:$0]  %s32, 256, %s1, [#allocation4]
    $region13: #{tpu_custom_call.1} parent=1 // pred_fallthru
      _
    // Predicated region
    $region14: #{tpu_custom_call.1} parent=1 // pred_check
      _
    $region15: #{tpu_custom_call.1} parent=1 // pred_check_branch
      %36 = sbr.rel (0) target = $region17
    $region16: #{tpu_custom_call.1} parent=1 // pred_region
      %37 = dma.done [#allocation4], 256
    $region17: #{tpu_custom_call.1} parent=1 // pred_fallthru
      _
    %38 = vsyncpa [#allocation3], 1
    %39 = vsyncpa [#allocation4], 1

</llo_original>
